<compile_context>
chip_gen: v7x
topology: tpu7x:2x2x1
jax: 0.10.0
libtpu: 0.0.40
codegen_flags: <defaults>
</compile_context>

<pallas_src>
import functools

import jax
import jax.numpy as jnp
from jax.experimental import pallas as pl
from jax.experimental.pallas import tpu as pltpu


def _dual_bpr_kernel(pos_ref, neg_ref, ptag_ref, ntag_ref, out_ref, acc_ref,
                     *, block_rows):
    s = pl.program_id(1)  # reduction axis (within this core's batch slice)

    # init vector accumulator on the first reduction step
    @pl.when(s == 0)
    def _():
        acc_ref[...] = jnp.zeros_like(acc_ref)

    # upcast inside the kernel (inputs may arrive as bf16 / int8 / f32)
    x = pos_ref[...].astype(jnp.float32) - neg_ref[...].astype(jnp.float32)
    # -logsigmoid(x) = softplus(-x), stable form
    neg_logsig = jnp.maximum(-x, 0.0) + jnp.log1p(jnp.exp(-jnp.abs(x)))
    tags = ptag_ref[...].astype(jnp.float32) * ntag_ref[...].astype(jnp.float32)
    vals = tags * neg_logsig                                  # (block_rows, S)

    # fold row groups onto the (8, S) accumulator: pure vreg adds on the VPU,
    # no cross-lane work per step.
    S = vals.shape[-1]
    acc_ref[...] += vals.reshape(block_rows // 8, 8, S).sum(axis=0)

    # finalize: hand this core's (8, S) partial sum to the output block.
    @pl.when(s == pl.num_programs(1) - 1)
    def _():
        out_ref[...] = acc_ref[...]


def _choose_block_rows(rows, target):
    """Largest multiple of 8 <= min(target, rows) that divides `rows`."""
    cap = min(target, rows)
    cap -= cap % 8
    for br in range(cap, 7, -8):
        if rows % br == 0:
            return br
    return 8


def dual_bpr_loss(pos_score, neg_score, pos_sel_tag, neg_sel_tag,
                  weight=None, target_block_rows=1024):
    """Pallas implementation of Dual_BPRLoss.forward. Returns a scalar f32."""
    assert (pos_score.shape == neg_score.shape ==
            pos_sel_tag.shape == neg_sel_tag.shape)
    B, S = pos_score.shape
    assert B % 8 == 0, "batch dim must be a multiple of 8 (sublane tiling)"

    # Split the batch across 2 cores when possible (v7x megacore); on v5e/v6e
    # the extra 'parallel' axis is harmless.
    n_par = 2 if (B % 16 == 0 and B >= 16) else 1
    rows_per_core = B // n_par
    block_rows = _choose_block_rows(rows_per_core, target_block_rows)
    n_steps = rows_per_core // block_rows

    kernel = functools.partial(_dual_bpr_kernel, block_rows=block_rows)

    in_spec = pl.BlockSpec((block_rows, S),
                           lambda p, s: (p * n_steps + s, 0))
    out = pl.pallas_call(
        kernel,
        out_shape=jax.ShapeDtypeStruct((n_par * 8, S), jnp.float32),
        grid_spec=pltpu.PrefetchScalarGridSpec(
            num_scalar_prefetch=0,
            grid=(n_par, n_steps),
            in_specs=[in_spec, in_spec, in_spec, in_spec],
            out_specs=pl.BlockSpec((8, S), lambda p, s: (p, 0)),
            scratch_shapes=[pltpu.VMEM((8, S), jnp.float32)],
        ),
        compiler_params=pltpu.CompilerParams(
            dimension_semantics=("parallel", "arbitrary"),
        ),
    )(pos_score, neg_score, pos_sel_tag, neg_sel_tag)

    # Tiny final reduction + mean + (optional) weight, hoisted out of the
    # per-element path. `weight` may be None, a Python scalar, or a jax scalar.
    loss = jnp.sum(out) / jnp.float32(B * S)
    if weight is not None:
        loss = loss * weight
    return loss


def _reference(pos_score, neg_score, pos_sel_tag, neg_sel_tag, weight=None):
    nls = -jax.nn.log_sigmoid(pos_score.astype(jnp.float32) -
                              neg_score.astype(jnp.float32))
    v = pos_sel_tag.astype(jnp.float32) * neg_sel_tag.astype(jnp.float32) * nls
    if weight is not None:
        v = v * weight
    return jnp.mean(v)


if __name__ == "__main__":
    key = jax.random.PRNGKey(0)
    k1, k2, k3, k4 = jax.random.split(key, 4)

    B, S = 32, 128  # small synthetic shapes: batch=32, 128 scores per row
    pos_score = jax.random.normal(k1, (B, S), dtype=jnp.float32)
    neg_score = jax.random.normal(k2, (B, S), dtype=jnp.float32)
    # tags stay in a narrow dtype (0/1 exact in bf16); kernel upcasts internally
    pos_sel_tag = jax.random.bernoulli(k3, 0.7, (B, S)).astype(jnp.bfloat16)
    neg_sel_tag = jax.random.bernoulli(k4, 0.7, (B, S)).astype(jnp.bfloat16)

    # weight=None path (module default)
    loss = dual_bpr_loss(pos_score, neg_score, pos_sel_tag, neg_sel_tag)
    loss = jax.block_until_ready(loss)
    ref = _reference(pos_score, neg_score, pos_sel_tag, neg_sel_tag)
    assert jnp.allclose(loss, ref, rtol=1e-5, atol=1e-5), (loss, ref)

    # scalar-weight path
    w = 0.5
    loss_w = dual_bpr_loss(pos_score, neg_score, pos_sel_tag, neg_sel_tag,
                           weight=w)
    loss_w = jax.block_until_ready(loss_w)
    ref_w = _reference(pos_score, neg_score, pos_sel_tag, neg_sel_tag, weight=w)
    assert jnp.allclose(loss_w, ref_w, rtol=1e-5, atol=1e-5), (loss_w, ref_w)

    print("KERNEL_OK")
</pallas_src>

<mosaic_0001>
module attributes {stable_mosaic.version = 11 : i64} {
  func.func @_dual_bpr_kernel(%arg0: i32, %arg1: i32, %arg2: memref<16x128xf32, #tpu.memory_space<vmem>>, %arg3: memref<16x128xf32, #tpu.memory_space<vmem>>, %arg4: memref<16x128xbf16, #tpu.memory_space<vmem>>, %arg5: memref<16x128xbf16, #tpu.memory_space<vmem>>, %arg6: memref<8x128xf32, #tpu.memory_space<vmem>>, %arg7: memref<8x128xf32, #tpu.memory_space<vmem>>) attributes {dimension_semantics = [#tpu.dimension_semantics<parallel>, #tpu.dimension_semantics<arbitrary>], iteration_bounds = array<i64: 2, 1>, scalar_prefetch = 0 : i64, scratch_operands = 1 : i64, tpu.core_type = #tpu.core_type<tc>, window_params = [{transform_indices = @transform_0, window_bounds = array<i64: 16, 128>}, {transform_indices = @transform_1, window_bounds = array<i64: 16, 128>}, {transform_indices = @transform_2, window_bounds = array<i64: 16, 128>}, {transform_indices = @transform_3, window_bounds = array<i64: 16, 128>}, {transform_indices = @transform_4, window_bounds = array<i64: 8, 128>}]} {
    %c0_i32 = arith.constant 0 : i32
    %0 = arith.cmpi eq, %arg1, %c0_i32 : i32
    %1 = arith.extui %0 : i1 to i32
    %c0_i32_0 = arith.constant 0 : i32
    %2 = arith.cmpi ne, %1, %c0_i32_0 : i32
    scf.if %2 {
      %cst_17 = arith.constant 0.000000e+00 : f32
      %30 = vector.broadcast %cst_17 : f32 to vector<8x128xf32>
      %c0_18 = arith.constant 0 : index
      %c0_19 = arith.constant 0 : index
      %31 = vector.load %arg7[%c0_18, %c0_19] : memref<8x128xf32, #tpu.memory_space<vmem>>, vector<8x128xf32>
      tpu.vector_store %arg7[%c0_18, %c0_19], %30 {strides = array<i32>} : memref<8x128xf32, #tpu.memory_space<vmem>>, vector<8x128xf32>,
    } else {
    }
    %c0 = arith.constant 0 : index
    %c0_1 = arith.constant 0 : index
    %3 = vector.load %arg2[%c0, %c0_1] : memref<16x128xf32, #tpu.memory_space<vmem>>, vector<16x128xf32>
    %c0_2 = arith.constant 0 : index
    %c0_3 = arith.constant 0 : index
    %4 = vector.load %arg3[%c0_2, %c0_3] : memref<16x128xf32, #tpu.memory_space<vmem>>, vector<16x128xf32>
    %5 = arith.subf %3, %4 : vector<16x128xf32>
    %cst = arith.constant 0.000000e+00 : f32
    %6 = vector.broadcast %cst : f32 to vector<16x128xf32>
    %7 = arith.subf %6, %5 : vector<16x128xf32>
    %cst_4 = arith.constant 0.000000e+00 : f32
    %8 = vector.broadcast %cst_4 : f32 to vector<16x128xf32>
    %9 = arith.maximumf %7, %8 : vector<16x128xf32>
    %10 = math.absf %5 : vector<16x128xf32>
    %cst_5 = arith.constant 0.000000e+00 : f32
    %11 = vector.broadcast %cst_5 : f32 to vector<16x128xf32>
    %12 = arith.subf %11, %10 : vector<16x128xf32>
    %13 = math.exp %12 : vector<16x128xf32>
    %14 = math.log1p %13 : vector<16x128xf32>
    %15 = arith.addf %9, %14 : vector<16x128xf32>
    %c0_6 = arith.constant 0 : index
    %c0_7 = arith.constant 0 : index
    %16 = vector.load %arg4[%c0_6, %c0_7] : memref<16x128xbf16, #tpu.memory_space<vmem>>, vector<16x128xbf16>
    %17 = arith.extf %16 : vector<16x128xbf16> to vector<16x128xf32>
    %c0_8 = arith.constant 0 : index
    %c0_9 = arith.constant 0 : index
    %18 = vector.load %arg5[%c0_8, %c0_9] : memref<16x128xbf16, #tpu.memory_space<vmem>>, vector<16x128xbf16>
    %19 = arith.extf %18 : vector<16x128xbf16> to vector<16x128xf32>
    %20 = arith.mulf %17, %19 : vector<16x128xf32>
    %21 = arith.mulf %20, %15 : vector<16x128xf32>
    %c0_10 = arith.constant 0 : index
    %c0_11 = arith.constant 0 : index
    %22 = vector.load %arg7[%c0_10, %c0_11] : memref<8x128xf32, #tpu.memory_space<vmem>>, vector<8x128xf32>
    %23 = vector.shape_cast %21 : vector<16x128xf32> to vector<2x8x128xf32>
    %cst_12 = arith.constant dense<0.000000e+00> : vector<8x128xf32>
    %24 = vector.multi_reduction <add>, %23, %cst_12 [0] : vector<2x8x128xf32> to vector<8x128xf32>
    %25 = arith.addf %22, %24 : vector<8x128xf32>
    %c0_13 = arith.constant 0 : index
    %c0_14 = arith.constant 0 : index
    %26 = vector.load %arg7[%c0_13, %c0_14] : memref<8x128xf32, #tpu.memory_space<vmem>>, vector<8x128xf32>
    tpu.vector_store %arg7[%c0_13, %c0_14], %25 {strides = array<i32>} : memref<8x128xf32, #tpu.memory_space<vmem>>, vector<8x128xf32>,
    %c0_i32_15 = arith.constant 0 : i32
    %27 = arith.cmpi eq, %arg1, %c0_i32_15 : i32
    %28 = arith.extui %27 : i1 to i32
    %c0_i32_16 = arith.constant 0 : i32
    %29 = arith.cmpi ne, %28, %c0_i32_16 : i32
    scf.if %29 {
      %c0_17 = arith.constant 0 : index
      %c0_18 = arith.constant 0 : index
      %30 = vector.load %arg7[%c0_17, %c0_18] : memref<8x128xf32, #tpu.memory_space<vmem>>, vector<8x128xf32>
      %c0_19 = arith.constant 0 : index
      %c0_20 = arith.constant 0 : index
      %31 = vector.load %arg6[%c0_19, %c0_20] : memref<8x128xf32, #tpu.memory_space<vmem>>, vector<8x128xf32>
      tpu.vector_store %arg6[%c0_19, %c0_20], %30 {strides = array<i32>} : memref<8x128xf32, #tpu.memory_space<vmem>>, vector<8x128xf32>,
    } else {
    }
    return
  }
  func.func @transform_0(%arg0: i32, %arg1: i32) -> (i32, i32) {
    %c1_i32 = arith.constant 1 : i32
    %0 = arith.muli %arg0, %c1_i32 : i32
    %1 = arith.addi %0, %arg1 : i32
    %c0_i32 = arith.constant 0 : i32
    %c0_i32_0 = arith.constant 0 : i32
    return %1, %c0_i32 : i32, i32
  }
  func.func @transform_1(%arg0: i32, %arg1: i32) -> (i32, i32) {
    %c1_i32 = arith.constant 1 : i32
    %0 = arith.muli %arg0, %c1_i32 : i32
    %1 = arith.addi %0, %arg1 : i32
    %c0_i32 = arith.constant 0 : i32
    %c0_i32_0 = arith.constant 0 : i32
    return %1, %c0_i32 : i32, i32
  }
  func.func @transform_2(%arg0: i32, %arg1: i32) -> (i32, i32) {
    %c1_i32 = arith.constant 1 : i32
    %0 = arith.muli %arg0, %c1_i32 : i32
    %1 = arith.addi %0, %arg1 : i32
    %c0_i32 = arith.constant 0 : i32
    %c0_i32_0 = arith.constant 0 : i32
    return %1, %c0_i32 : i32, i32
  }
  func.func @transform_3(%arg0: i32, %arg1: i32) -> (i32, i32) {
    %c1_i32 = arith.constant 1 : i32
    %0 = arith.muli %arg0, %c1_i32 : i32
    %1 = arith.addi %0, %arg1 : i32
    %c0_i32 = arith.constant 0 : i32
    %c0_i32_0 = arith.constant 0 : i32
    return %1, %c0_i32 : i32, i32
  }
  func.func @transform_4(%arg0: i32, %arg1: i32) -> (i32, i32) {
    %c0_i32 = arith.constant 0 : i32
    %c0_i32_0 = arith.constant 0 : i32
    return %arg0, %c0_i32 : i32, i32
  }
}

</mosaic_0001>

<llo_original>
// kernel: tpu_custom_call.1
$region0: #{tpu_custom_call.1}
  #allocation0 [shape = 'u32[]', space=smem, size = 0x4, offset = 0x4, fixed_abs, tag = 'smem constant byte address 0x4 - core index']
  #allocation1 [shape = 'u32[144,128]{1,0:T(1,128)}', space=vmem, size = 0x12000, scoped, tag = 'internal scratch']
  #allocation2 [shape = 'f32[8,128]{1,0:T(8,128)}', space=vmem, size = 0x1000, scoped, tag = 'scratch operand']
  %s0 = inlined_call_operand.hbm [shape: f32[32,128], index: 0, kind: input, shape index: {}]
  %s1 = inlined_call_operand.hbm [shape: f32[32,128], index: 1, kind: input, shape index: {}]
  %s2 = inlined_call_operand.hbm [shape: bf16[32,128], index: 2, kind: input, shape index: {}]
  %s3 = inlined_call_operand.hbm [shape: bf16[32,128], index: 3, kind: input, shape index: {}]
  %s4 = inlined_call_operand.hbm [shape: f32[16,128], index: 4, kind: output, shape index: {}]
  %s5 = sld [smem:[#allocation0]]
  $region73: #{tpu_custom_call.1} parent=0
    _
  %s7 = ssub.s32 1, %s5
  %s8 = scalar_select 0, %s7, %s5
  $region1: #{tpu_custom_call.1} parent=0
    #allocation3 [shape = 'u8[16384]{0}', space=vmem, size = 0x4000, scoped, tag = 'input window, operand 0']
    #allocation4 [shape = 's32[2]{0}', space=sflag, size = 0x8, scoped, tag = 'scoped memory for tpu_custom_call.1']
    #allocation5 [shape = 's32[2]{0}', space=sflag, size = 0x8, scoped, tag = 'scoped memory for tpu_custom_call.1']
    #allocation6 [shape = 'u8[16384]{0}', space=vmem, size = 0x4000, scoped, tag = 'input window, operand 1']
    #allocation7 [shape = 's32[2]{0}', space=sflag, size = 0x8, scoped, tag = 'scoped memory for tpu_custom_call.1']
    #allocation8 [shape = 'u8[8192]{0}', space=vmem, size = 0x2000, scoped, tag = 'input window, operand 2']
    #allocation9 [shape = 'u8[8192]{0}', space=vmem, size = 0x2000, scoped, tag = 'input window, operand 3']
    #allocation10 [shape = 's32[2]{0}', space=sflag, size = 0x8, scoped, tag = 'scoped memory for tpu_custom_call.1']
    #allocation11 [shape = 'u8[8192]{0}', space=vmem, size = 0x2000, scoped, tag = 'output window, operand 0']
    %9 = vsyncpa [#allocation4], 0
    %s10 = scalar_lea.sflag [#allocation4], 1
    %11 = vsyncpa %s10, 0
    %12 = vsyncpa [#allocation7], 0
    %s13 = scalar_lea.sflag [#allocation7], 1
    %14 = vsyncpa %s13, 0
    %15 = vsyncpa [#allocation10], 0
    %s16 = scalar_lea.sflag [#allocation10], 1
    %17 = vsyncpa %s16, 0
    %18 = vsyncpa [#allocation5], 0
    %s19 = scalar_lea.sflag [#allocation5], 1
    %20 = vsyncpa %s19, 0
    loop: start=0, step=1, limit=4
    $region2: #{tpu_custom_call.1} parent=1 // loop_pre_header
      _
    $region3: #{tpu_custom_call.1} parent=1 // loop_header
      %s22 = sphi 0, %s26
      %p23 = scmp.ge.s32.totalorder %s22, 4
      %s29 = sphi 0, %s41
      %s30 = sphi 0, %s37
      %s31 = sphi 0, %s29
      %s32 = sphi 0, %s30
      %s33 = sphi 0, %s31
      %s34 = sphi 0, %s32
      %s46 = sphi 0, %s48
      %s49 = sphi 0, %s46
      %s50 = sphi 0, %s49
      %s66 = sphi 0, %s50
      %s74 = sphi 0, %s76
      %s77 = sphi 0, %s74
      %s78 = sphi 0, %s77
      %s94 = sphi 0, %s78
      %s102 = sphi 0, %s104
      %s105 = sphi 0, %s102
      %s106 = sphi 0, %s105
      %s122 = sphi 0, %s106
      %s130 = sphi 0, %s132
      %s133 = sphi 0, %s130
      %s134 = sphi 0, %s133
      %s150 = sphi 0, %s134
      %s156 = sphi 0, %s158
      %s159 = sphi 0, %s156
      %s160 = sphi 0, %s159
      %s176 = sphi 0, %s160
    $region4: #{tpu_custom_call.1} parent=1 // loop_header_branch
      %25 = sbr.rel (%p23) target = $region8
    $region5: #{tpu_custom_call.1} parent=1 // loop_body
      %s27 = ssub.s32 %s22, 1
      %s28 = ssub.s32 %s22, 2
      %s35 = sadd.s32 1, %s30
      %p36 = scmp.ge.s32.totalorder %s35, 1
      %s37 = scalar_select %p36, 0, %s35
      %s38 = sadd.s32 1, %s29
      %s39 = scalar_select %p36, %s38, %s29
      %p40 = scmp.ge.s32.totalorder %s39, 2
      %s41 = scalar_select %p40, 0, %s39
      %s42 = sadd.s32 %s29, %s30
      %s43 = sadd.s32 %s41, %s37
      %s44 = ssub.s32 %s42, %s43
      %p45 = scmp.eq.s32.totalorder %s44, 0
      %s47 = sadd.s32 %s46, 1
      %s48 = scalar_select %p45, %s46, %s47
      %p51 = pneg %p45
      %p52 = scmp.eq.s32.totalorder %s22, 1
      %p53 = por %p51, %p52
      %p54 = scmp.ne.s32.totalorder %s46, %s49
      %p55 = scmp.eq.s32.totalorder %s22, 0
      %p56 = por %p54, %p55
      %p57 = scmp.ne.s32.totalorder %s46, %s49
      %p58 = scmp.eq.s32.totalorder %s27, 1
      %p59 = por %p57, %p58
      %p60 = scmp.ne.s32.totalorder %s49, %s50
      %p61 = scmp.eq.s32.totalorder %s27, 0
      %p62 = por %p60, %p61
      %p63 = scmp.ne.s32.totalorder %s49, %s50
      %p64 = scmp.eq.s32.totalorder %s28, 1
      %p65 = por %p63, %p64
      %p67 = scmp.ne.s32.totalorder %s50, %s66
      %p68 = scmp.eq.s32.totalorder %s28, 0
      %p69 = por %p67, %p68
      %s70 = sadd.s32 %s29, %s30
      %s71 = sadd.s32 %s41, %s37
      %s72 = ssub.s32 %s70, %s71
      %p73 = scmp.eq.s32.totalorder %s72, 0
      %s75 = sadd.s32 %s74, 1
      %s76 = scalar_select %p73, %s74, %s75
      %p79 = pneg %p73
      %p80 = scmp.eq.s32.totalorder %s22, 1
      %p81 = por %p79, %p80
      %p82 = scmp.ne.s32.totalorder %s74, %s77
      %p83 = scmp.eq.s32.totalorder %s22, 0
      %p84 = por %p82, %p83
      %p85 = scmp.ne.s32.totalorder %s74, %s77
      %p86 = scmp.eq.s32.totalorder %s27, 1
      %p87 = por %p85, %p86
      %p88 = scmp.ne.s32.totalorder %s77, %s78
      %p89 = scmp.eq.s32.totalorder %s27, 0
      %p90 = por %p88, %p89
      %p91 = scmp.ne.s32.totalorder %s77, %s78
      %p92 = scmp.eq.s32.totalorder %s28, 1
      %p93 = por %p91, %p92
      %p95 = scmp.ne.s32.totalorder %s78, %s94
      %p96 = scmp.eq.s32.totalorder %s28, 0
      %p97 = por %p95, %p96
      %s98 = sadd.s32 %s29, %s30
      %s99 = sadd.s32 %s41, %s37
      %s100 = ssub.s32 %s98, %s99
      %p101 = scmp.eq.s32.totalorder %s100, 0
      %s103 = sadd.s32 %s102, 1
      %s104 = scalar_select %p101, %s102, %s103
      %p107 = pneg %p101
      %p108 = scmp.eq.s32.totalorder %s22, 1
      %p109 = por %p107, %p108
      %p110 = scmp.ne.s32.totalorder %s102, %s105
      %p111 = scmp.eq.s32.totalorder %s22, 0
      %p112 = por %p110, %p111
      %p113 = scmp.ne.s32.totalorder %s102, %s105
      %p114 = scmp.eq.s32.totalorder %s27, 1
      %p115 = por %p113, %p114
      %p116 = scmp.ne.s32.totalorder %s105, %s106
      %p117 = scmp.eq.s32.totalorder %s27, 0
      %p118 = por %p116, %p117
      %p119 = scmp.ne.s32.totalorder %s105, %s106
      %p120 = scmp.eq.s32.totalorder %s28, 1
      %p121 = por %p119, %p120
      %p123 = scmp.ne.s32.totalorder %s106, %s122
      %p124 = scmp.eq.s32.totalorder %s28, 0
      %p125 = por %p123, %p124
      %s126 = sadd.s32 %s29, %s30
      %s127 = sadd.s32 %s41, %s37
      %s128 = ssub.s32 %s126, %s127
      %p129 = scmp.eq.s32.totalorder %s128, 0
      %s131 = sadd.s32 %s130, 1
      %s132 = scalar_select %p129, %s130, %s131
      %p135 = pneg %p129
      %p136 = scmp.eq.s32.totalorder %s22, 1
      %p137 = por %p135, %p136
      %p138 = scmp.ne.s32.totalorder %s130, %s133
      %p139 = scmp.eq.s32.totalorder %s22, 0
      %p140 = por %p138, %p139
      %p141 = scmp.ne.s32.totalorder %s130, %s133
      %p142 = scmp.eq.s32.totalorder %s27, 1
      %p143 = por %p141, %p142
      %p144 = scmp.ne.s32.totalorder %s133, %s134
      %p145 = scmp.eq.s32.totalorder %s27, 0
      %p146 = por %p144, %p145
      %p147 = scmp.ne.s32.totalorder %s133, %s134
      %p148 = scmp.eq.s32.totalorder %s28, 1
      %p149 = por %p147, %p148
      %p151 = scmp.ne.s32.totalorder %s134, %s150
      %p152 = scmp.eq.s32.totalorder %s28, 0
      %p153 = por %p151, %p152
      %s154 = ssub.s32 %s29, %s41
      %p155 = scmp.eq.s32.totalorder %s154, 0
      %s157 = sadd.s32 %s156, 1
      %s158 = scalar_select %p155, %s156, %s157
      %p161 = pneg %p155
      %p162 = scmp.eq.s32.totalorder %s22, 1
      %p163 = por %p161, %p162
      %p164 = scmp.ne.s32.totalorder %s156, %s159
      %p165 = scmp.eq.s32.totalorder %s22, 0
      %p166 = por %p164, %p165
      %p167 = scmp.ne.s32.totalorder %s156, %s159
      %p168 = scmp.eq.s32.totalorder %s27, 1
      %p169 = por %p167, %p168
      %p170 = scmp.ne.s32.totalorder %s159, %s160
      %p171 = scmp.eq.s32.totalorder %s27, 0
      %p172 = por %p170, %p171
      %p173 = scmp.ne.s32.totalorder %s159, %s160
      %p174 = scmp.eq.s32.totalorder %s28, 1
      %p175 = por %p173, %p174
      %p177 = scmp.ne.s32.totalorder %s160, %s176
      %p178 = scmp.eq.s32.totalorder %s28, 0
      %p179 = por %p177, %p178
      %p180 = scmp.le.s32.totalorder 1, %s22
      %p181 = scmp.lt.s32.totalorder %s22, 3
      %p182 = pnand %p180, %p181
      %p183 = pneg %p182
      // Predicated region
      $region9: #{tpu_custom_call.1} parent=5 // pred_check
        _
      $region10: #{tpu_custom_call.1} parent=5 // pred_check_branch
        %185 = sbr.rel (%p182) target = $region12
      $region11: #{tpu_custom_call.1} parent=5 // pred_region
        %s186 = ssub.s32 %s22, 1
      $region12: #{tpu_custom_call.1} parent=5 // pred_fallthru
        _
      %p187 = scmp.lt.s32.totalorder %s22, 2
      // Predicated region
      $region13: #{tpu_custom_call.1} parent=5 // pred_check
        %p188 = pneg %p187
      $region14: #{tpu_custom_call.1} parent=5 // pred_check_branch
        %190 = sbr.rel (%p188) target = $region16
      $region15: #{tpu_custom_call.1} parent=5 // pred_region
        // Predicated region
        $region17: #{tpu_custom_call.1} parent=15 // pred_check
          %p191 = pneg %p56
        $region18: #{tpu_custom_call.1} parent=15 // pred_check_branch
          %193 = sbr.rel (%p191) target = $region20
        $region19: #{tpu_custom_call.1} parent=15 // pred_region
          %s194 = sand.u32 %s46, 1
          %s195 = scalar_lea.sflag [#allocation4], %s194
          %s196 = sand.u32 %s46, 1
          %s197 = smul.addr %s196, 16
          %s198 = scalar_lea.vmem [#allocation3], %s197
          %s199 = sadd.s32 %s29, %s30
          %s200 = smul.u32 2, %s199
          %s202 = ssub.s32 256, 256
          %203 = vsyncadd %s195, %s202
          %s204 = smul.addr %s200, 128
          %s205 = scalar_lea.hbm %s0, %s204
          %s206 = sshll.u32 %s198, 4
          %s207 = int_to_ptr.vmem [resolvable:$true] %s206
          %212 = dma.hbm_to_vmem [thread:$0]  %s205, 256, %s207, %s195, 128, 128, 8
        $region20: #{tpu_custom_call.1} parent=15 // pred_fallthru
          _
        // Predicated region
        $region21: #{tpu_custom_call.1} parent=15 // pred_check
          %p213 = pneg %p84
        $region22: #{tpu_custom_call.1} parent=15 // pred_check_branch
          %215 = sbr.rel (%p213) target = $region24
        $region23: #{tpu_custom_call.1} parent=15 // pred_region
          %s216 = sand.u32 %s22, 1
          %s217 = scalar_lea.sflag [#allocation7], %s216
          %s218 = sand.u32 %s74, 1
          %s219 = smul.addr %s218, 16
          %s220 = scalar_lea.vmem [#allocation6], %s219
          %s221 = sadd.s32 %s29, %s30
          %s222 = smul.u32 2, %s221
          %s224 = ssub.s32 256, 256
          %225 = vsyncadd %s217, %s224
          %s226 = smul.addr %s222, 128
          %s227 = scalar_lea.hbm %s1, %s226
          %s228 = sshll.u32 %s220, 4
          %s229 = int_to_ptr.vmem [resolvable:$true] %s228
          %234 = dma.hbm_to_vmem [thread:$0]  %s227, 256, %s229, %s217, 128, 128, 8
        $region24: #{tpu_custom_call.1} parent=15 // pred_fallthru
          _
        // Predicated region
        $region25: #{tpu_custom_call.1} parent=15 // pred_check
          %p235 = pneg %p112
        $region26: #{tpu_custom_call.1} parent=15 // pred_check_branch
          %237 = sbr.rel (%p235) target = $region28
        $region27: #{tpu_custom_call.1} parent=15 // pred_region
          %s238 = sand.u32 %s22, 1
          %s239 = scalar_lea.sflag [#allocation7], %s238
          %s240 = sand.u32 %s102, 1
          %s241 = smul.addr %s240, 8
          %s242 = scalar_lea.vmem [#allocation8], %s241
          %s243 = sadd.s32 %s29, %s30
          %s244 = smul.u32 2, %s243
          %s246 = ssub.s32 128, 128
          %247 = vsyncadd %s239, %s246
          %s248 = smul.addr %s244, 64
          %s249 = scalar_lea.hbm %s2, %s248
          %s250 = sshll.u32 %s242, 4
          %s251 = int_to_ptr.vmem [resolvable:$true] %s250
          %256 = dma.hbm_to_vmem [thread:$0]  %s249, 128, %s251, %s239, 64, 64, 4
        $region28: #{tpu_custom_call.1} parent=15 // pred_fallthru
          _
        // Predicated region
        $region29: #{tpu_custom_call.1} parent=15 // pred_check
          %p257 = pneg %p140
        $region30: #{tpu_custom_call.1} parent=15 // pred_check_branch
          %259 = sbr.rel (%p257) target = $region32
        $region31: #{tpu_custom_call.1} parent=15 // pred_region
          %s260 = sand.u32 %s130, 1
          %s261 = scalar_lea.sflag [#allocation10], %s260
          %s262 = sand.u32 %s130, 1
          %s263 = smul.addr %s262, 8
          %s264 = scalar_lea.vmem [#allocation9], %s263
          %s265 = sadd.s32 %s29, %s30
          %s266 = smul.u32 2, %s265
          %s268 = ssub.s32 128, 128
          %269 = vsyncadd %s261, %s268
          %s270 = smul.addr %s266, 64
          %s271 = scalar_lea.hbm %s3, %s270
          %s272 = sshll.u32 %s264, 4
          %s273 = int_to_ptr.vmem [resolvable:$true] %s272
          %278 = dma.hbm_to_vmem [thread:$0]  %s271, 128, %s273, %s261, 64, 64, 4
        $region32: #{tpu_custom_call.1} parent=15 // pred_fallthru
          _
      $region16: #{tpu_custom_call.1} parent=5 // pred_fallthru
        _
      %p279 = scmp.le.s32.totalorder 1, %s22
      %p280 = scmp.lt.s32.totalorder %s22, 3
      %p281 = pnand %p279, %p280
      %p282 = pneg %p281
      // Predicated region
      $region33: #{tpu_custom_call.1} parent=5 // pred_check
        _
      $region34: #{tpu_custom_call.1} parent=5 // pred_check_branch
        %284 = sbr.rel (%p281) target = $region36
      $region35: #{tpu_custom_call.1} parent=5 // pred_region
        %s285 = ssub.s32 %s22, 1
        %s286 = sand.u32 %s49, 1
        %s287 = scalar_lea.sflag [#allocation4], %s286
        %s288 = sand.u32 %s49, 1
        %s289 = smul.addr %s288, 16
        %s290 = scalar_lea.vmem [#allocation3], %s289
        // Predicated region
        $region37: #{tpu_custom_call.1} parent=35 // pred_check
          %p291 = pneg %p62
        $region38: #{tpu_custom_call.1} parent=35 // pred_check_branch
          %293 = sbr.rel (%p291) target = $region40
        $region39: #{tpu_custom_call.1} parent=35 // pred_region
          %294 = dma.done %s287, 256
        $region40: #{tpu_custom_call.1} parent=35 // pred_fallthru
          _
        %s295 = sand.u32 %s27, 1
        %s296 = scalar_lea.sflag [#allocation7], %s295
        %s297 = sand.u32 %s77, 1
        %s298 = smul.addr %s297, 16
        %s299 = scalar_lea.vmem [#allocation6], %s298
        // Predicated region
        $region41: #{tpu_custom_call.1} parent=35 // pred_check
          %p300 = pneg %p90
        $region42: #{tpu_custom_call.1} parent=35 // pred_check_branch
          %302 = sbr.rel (%p300) target = $region44
        $region43: #{tpu_custom_call.1} parent=35 // pred_region
          %303 = dma.done %s296, 256
        $region44: #{tpu_custom_call.1} parent=35 // pred_fallthru
          _
        %s304 = sand.u32 %s27, 1
        %s305 = scalar_lea.sflag [#allocation7], %s304
        %s306 = sand.u32 %s105, 1
        %s307 = smul.addr %s306, 8
        %s308 = scalar_lea.vmem [#allocation8], %s307
        // Predicated region
        $region45: #{tpu_custom_call.1} parent=35 // pred_check
          %p309 = pneg %p118
        $region46: #{tpu_custom_call.1} parent=35 // pred_check_branch
          %311 = sbr.rel (%p309) target = $region48
        $region47: #{tpu_custom_call.1} parent=35 // pred_region
          %312 = dma.done %s305, 128
        $region48: #{tpu_custom_call.1} parent=35 // pred_fallthru
          _
        %s313 = sand.u32 %s133, 1
        %s314 = scalar_lea.sflag [#allocation10], %s313
        %s315 = sand.u32 %s133, 1
        %s316 = smul.addr %s315, 8
        %s317 = scalar_lea.vmem [#allocation9], %s316
        // Predicated region
        $region49: #{tpu_custom_call.1} parent=35 // pred_check
          %p318 = pneg %p146
        $region50: #{tpu_custom_call.1} parent=35 // pred_check_branch
          %320 = sbr.rel (%p318) target = $region52
        $region51: #{tpu_custom_call.1} parent=35 // pred_region
          %321 = dma.done %s314, 128
        $region52: #{tpu_custom_call.1} parent=35 // pred_fallthru
          _
        %s322 = sand.u32 %s49, 1
        %s323 = scalar_lea.sflag [#allocation4], %s322
        %s324 = sand.u32 %s49, 1
        %s325 = smul.addr %s324, 16
        %s326 = scalar_lea.vmem [#allocation3], %s325
        %p327 = pneg %p62
        %p328 = pneg %p59
        %s329 = sand.u32 %s27, 1
        %s330 = scalar_lea.sflag [#allocation7], %s329
        %s331 = sand.u32 %s77, 1
        %s332 = smul.addr %s331, 16
        %s333 = scalar_lea.vmem [#allocation6], %s332
        %p334 = pneg %p90
        %p335 = pneg %p87
        %s336 = sand.u32 %s27, 1
        %s337 = scalar_lea.sflag [#allocation7], %s336
        %s338 = sand.u32 %s105, 1
        %s339 = smul.addr %s338, 8
        %s340 = scalar_lea.vmem [#allocation8], %s339
        %p341 = pneg %p118
        %p342 = pneg %p115
        %s343 = sand.u32 %s133, 1
        %s344 = scalar_lea.sflag [#allocation10], %s343
        %s345 = sand.u32 %s133, 1
        %s346 = smul.addr %s345, 8
        %s347 = scalar_lea.vmem [#allocation9], %s346
        %p348 = pneg %p146
        %p349 = pneg %p143
        %p350 = pneg %p172
        %p351 = pneg %p169
        %s352 = sand.u32 %s159, 1
        %s353 = scalar_lea.sflag [#allocation5], %s352
        %s354 = sand.u32 %s159, 1
        %s355 = smul.addr %s354, 8
        %s356 = scalar_lea.vmem [#allocation11], %s355
        %s357 = sadd.s32 %s31, %s32
        %s358 = smul.u32 2, %s357
        %s359 = sadd.s32 %s31, %s32
        %s360 = smul.u32 2, %s359
        %s361 = sadd.s32 %s31, %s32
        %s362 = smul.u32 2, %s361
        %s363 = sadd.s32 %s31, %s32
        %s364 = smul.u32 2, %s363
        %p365 = scmp.eq.s32.totalorder %s32, 0
        // Predicated region
        $region53: #{tpu_custom_call.1} parent=35 // pred_check
          %p366 = pneg %p365
        $region54: #{tpu_custom_call.1} parent=35 // pred_check_branch
          %368 = sbr.rel (%p366) target = $region56
        $region55: #{tpu_custom_call.1} parent=35 // pred_region
          %369 = vst [vmem:[#allocation2] sm:$0xff] 0.0
        $region56: #{tpu_custom_call.1} parent=35 // pred_fallthru
          _
        %v370 = vld [vmem:[%s290] sm:$0xff]
        %v371 = vld [vmem:[%s290 + $0x8] sm:$0xff]
        %v372 = vld [vmem:[%s299] sm:$0xff]
        %v373 = vld [vmem:[%s299 + $0x8] sm:$0xff]
        %v374 = vsub.f32 %v370, %v372
        %v375 = vsub.f32 %v371, %v373
        %v376 = vsub.f32 0.0, %v374
        %v377 = vsub.f32 0.0, %v375
        %v378 = vmax.f32 %v376, 0.0
        %v379 = vmax.f32 %v377, 0.0
        %v380 = vand.u32 2147483647, %v374
        %v381 = vand.u32 2147483647, %v375
        %v382 = vsub.f32 0.0, %v380
        %v383 = vsub.f32 0.0, %v381
        %v384 = vmul.f32 %v382, 1.442695
        %v385 = vpow.pop %v384
        %v386 = vmul.f32 %v383, 1.442695
        %v387 = vpow.pop %v386
        %v388 = vadd.f32 %v385, 1.0
        %v389 = vlog2.pop %v388
        %v390 = vmul.f32 %v389, 0.6931472
        %v391 = vmul.f32 -0.5, %v385
        %v392 = vadd.f32 %v391, 1.0
        %v393 = vmul.f32 %v392, %v385
        %v394 = vand.u32 2147483647, %v385
        %vm395 = vcmp.lt.f32.partialorder %v394, 0.0004427343
        %v396 = vsel %vm395, %v393, %v390
        %v397 = vadd.f32 %v387, 1.0
        %v398 = vlog2.pop %v397
        %v399 = vmul.f32 %v398, 0.6931472
        %v400 = vmul.f32 -0.5, %v387
        %v401 = vadd.f32 %v400, 1.0
        %v402 = vmul.f32 %v401, %v387
        %v403 = vand.u32 2147483647, %v387
        %vm404 = vcmp.lt.f32.partialorder %v403, 0.0004427343
        %v405 = vsel %vm404, %v402, %v399
        %v406 = vadd.f32 %v378, %v396
        %v407 = vadd.f32 %v379, %v405
        %v408 = vld [vmem:[%s308] sm:$0xf]
        %v409 = vld [vmem:[%s308 + $0x4] sm:$0xf]
        %v410 = vunpack.c.l.bf16 %v408
        %v411 = vunpack.c.l.bf16 %v409
        %v412 = vld [vmem:[%s317] sm:$0xf]
        %v413 = vld [vmem:[%s317 + $0x4] sm:$0xf]
        %v414 = vunpack.c.l.bf16 %v412
        %v415 = vunpack.c.l.bf16 %v413
        %v416 = vmul.f32 %v410, %v414
        %v417 = vmul.f32 %v411, %v415
        %v418 = vmul.f32 %v416, %v406
        %v419 = vmul.f32 %v417, %v407
        %v420 = vld [vmem:[#allocation2] sm:$0xff]
        %v421 = vadd.f32 %v418, %v419
        %v422 = vadd.f32 %v420, %v421
        %423 = vst [vmem:[#allocation2] sm:$0xff] %v422
        // Predicated region
        $region57: #{tpu_custom_call.1} parent=35 // pred_check
          %p424 = pneg %p365
        $region58: #{tpu_custom_call.1} parent=35 // pred_check_branch
          %426 = sbr.rel (%p424) target = $region60
        $region59: #{tpu_custom_call.1} parent=35 // pred_region
          %v427 = vld [vmem:[#allocation2] sm:$0xff]
          %428 = vst [vmem:[%s356] sm:$0xff] %v427
        $region60: #{tpu_custom_call.1} parent=35 // pred_fallthru
          _
        %s429 = sand.u32 %s159, 1
        %s430 = scalar_lea.sflag [#allocation5], %s429
        %s431 = sand.u32 %s159, 1
        %s432 = smul.addr %s431, 8
        %s433 = scalar_lea.vmem [#allocation11], %s432
        // Predicated region
        $region61: #{tpu_custom_call.1} parent=35 // pred_check
          %p434 = pneg %p169
        $region62: #{tpu_custom_call.1} parent=35 // pred_check_branch
          %436 = sbr.rel (%p434) target = $region64
        $region63: #{tpu_custom_call.1} parent=35 // pred_region
          %s438 = ssub.s32 128, 128
          %439 = vsyncadd %s430, %s438
          %s440 = smul.addr %s31, 128
          %s441 = scalar_lea.hbm %s4, %s440
          %s443 = sshll.u32 %s433, 4
          %s444 = int_to_ptr.vmem [resolvable:$true] %s443
          %446 = dma.vmem_to_hbm [thread:$0]  %s444, 128, %s441, %s430
        $region64: #{tpu_custom_call.1} parent=35 // pred_fallthru
          _
      $region36: #{tpu_custom_call.1} parent=5 // pred_fallthru
        _
      %p447 = scmp.le.s32.totalorder 2, %s22
      // Predicated region
      $region65: #{tpu_custom_call.1} parent=5 // pred_check
        %p448 = pneg %p447
      $region66: #{tpu_custom_call.1} parent=5 // pred_check_branch
        %450 = sbr.rel (%p448) target = $region68
      $region67: #{tpu_custom_call.1} parent=5 // pred_region
        %s451 = ssub.s32 %s22, 2
        // Predicated region
        $region69: #{tpu_custom_call.1} parent=67 // pred_check
          %p452 = pneg %p175
        $region70: #{tpu_custom_call.1} parent=67 // pred_check_branch
          %454 = sbr.rel (%p452) target = $region72
        $region71: #{tpu_custom_call.1} parent=67 // pred_region
          %s455 = sand.u32 %s160, 1
          %s456 = scalar_lea.sflag [#allocation5], %s455
          %s457 = sand.u32 %s160, 1
          %s458 = smul.addr %s457, 8
          %s459 = scalar_lea.vmem [#allocation11], %s458
          %460 = dma.done %s456, 128
        $region72: #{tpu_custom_call.1} parent=67 // pred_fallthru
          _
      $region68: #{tpu_custom_call.1} parent=5 // pred_fallthru
        _
    $region6: #{tpu_custom_call.1} parent=1 // loop_footer
      %s26 = sadd.s32 1, %s22
    $region7: #{tpu_custom_call.1} parent=1 // loop_footer_branch
      %21 = sbr.rel target = $region3
    $region8: #{tpu_custom_call.1} parent=1 // loop_exit
      _
    %461 = vsyncpa [#allocation4], 1
    %s462 = scalar_lea.sflag [#allocation4], 1
    %463 = vsyncpa %s462, 1
    %464 = vsyncpa [#allocation7], 1
    %s465 = scalar_lea.sflag [#allocation7], 1
    %466 = vsyncpa %s465, 1
    %467 = vsyncpa [#allocation10], 1
    %s468 = scalar_lea.sflag [#allocation10], 1
    %469 = vsyncpa %s468, 1
    %470 = vsyncpa [#allocation5], 1
    %s471 = scalar_lea.sflag [#allocation5], 1
    %472 = vsyncpa %s471, 1

</llo_original>
